<compile_context>
chip_gen: v6e
topology: v6e:2x2x1
jax: 0.10.0
libtpu: 0.0.40
codegen_flags: <defaults>
</compile_context>

<pallas_src>
import math

import jax
import jax.numpy as jnp
from jax.experimental import pallas as pl
from jax.experimental.pallas import tpu as pltpu


def _round_up(x, m):
    return ((x + m - 1) // m) * m


def _make_fused_ae_kernel(out_sizes):
    """Build a fused kernel for a chain of Linear+CosineActivation layers.

    out_sizes: output feature size of each layer, in order.
    Kernel signature: (x_ref, w_ref_0..w_ref_{n-1}, b_ref, o_ref).
    """
    n_layers = len(out_sizes)
    offsets = [0]
    for s in out_sizes:
        offsets.append(offsets[-1] + s)

    def kernel(x_ref, *rest):
        w_refs = rest[:n_layers]
        b_ref = rest[n_layers]       # (1, sum(out_sizes)), all biases concatenated
        o_ref = rest[n_layers + 1]

        h = x_ref[...]               # (tb, in_f) f32, stays in vregs/VMEM
        for li in range(n_layers):
            z = jnp.dot(h, w_refs[li][...], preferred_element_type=jnp.float32)
            z = z + b_ref[:, offsets[li]:offsets[li + 1]]   # (1, out) broadcasts
            h = jnp.cos(z) - z       # CosineActivation
        o_ref[...] = h.astype(o_ref.dtype)

    return kernel


def ae_forward(params, x, *, batch_tile=256):
    """Fused encoder+decoder forward pass as a single Pallas kernel.

    x: (B, layer_sizes[0]) float32
    returns (B, layer_sizes[0]) float32
    """
    layers = params["encoder"] + params["decoder"]
    ws = [w for (w, _) in layers]
    bs = [b for (_, b) in layers]
    out_sizes = [int(w.shape[1]) for w in ws]
    b_cat = jnp.concatenate(bs).reshape(1, -1)   # (1, sum(out_f))

    B, in_f = x.shape
    out_f = out_sizes[-1]

    # Batch tile: multiple of 8 (f32 sublane), capped at batch_tile.  Pad the
    # batch so the grid divides evenly; padded rows are sliced off afterwards.
    tb = min(batch_tile, _round_up(B, 8))
    padded_b = _round_up(B, tb)
    if padded_b != B:
        x = jnp.pad(x, ((0, padded_b - B), (0, 0)))
    grid = (padded_b // tb,)

    kernel = _make_fused_ae_kernel(out_sizes)

    # x tile follows the grid; weights/biases use a constant (0,0) index_map so
    # Pallas keeps the same block resident across all grid steps.
    in_specs = [pl.BlockSpec((tb, in_f), lambda i: (i, 0))]
    for w in ws:
        in_specs.append(pl.BlockSpec(w.shape, lambda i: (0, 0)))
    in_specs.append(pl.BlockSpec(b_cat.shape, lambda i: (0, 0)))

    out = pl.pallas_call(
        kernel,
        out_shape=jax.ShapeDtypeStruct((padded_b, out_f), jnp.float32),
        grid_spec=pltpu.PrefetchScalarGridSpec(
            num_scalar_prefetch=0,
            grid=grid,
            in_specs=in_specs,
            out_specs=pl.BlockSpec((tb, out_f), lambda i: (i, 0)),
        ),
        compiler_params=pltpu.CompilerParams(
            # Batch axis is embarrassingly parallel -> lets v7x shard grid
            # steps across its 2 TensorCores; neutral on v5e/v6e.
            dimension_semantics=("parallel",),
        ),
    )(x, *ws, b_cat)

    return out[:B]


def init_ae_params(layer_sizes, key):
    """Deterministic params mirroring torch.nn.Linear default init:
    U(-1/sqrt(fan_in), 1/sqrt(fan_in)).  Weights stored as (in, out)."""
    params = {"encoder": [], "decoder": []}

    # Encoder: layer_sizes[i] -> layer_sizes[i+1]
    for i in range(len(layer_sizes) - 1):
        fan_in, fan_out = layer_sizes[i], layer_sizes[i + 1]
        key, kw, kb = jax.random.split(key, 3)
        bound = 1.0 / math.sqrt(fan_in)
        w = jax.random.uniform(kw, (fan_in, fan_out), jnp.float32, -bound, bound)
        b = jax.random.uniform(kb, (fan_out,), jnp.float32, -bound, bound)
        params["encoder"].append((w, b))

    # Decoder: layer_sizes[i] -> layer_sizes[i-1], for i = L-1 .. 1
    for i in range(len(layer_sizes) - 1, 0, -1):
        fan_in, fan_out = layer_sizes[i], layer_sizes[i - 1]
        key, kw, kb = jax.random.split(key, 3)
        bound = 1.0 / math.sqrt(fan_in)
        w = jax.random.uniform(kw, (fan_in, fan_out), jnp.float32, -bound, bound)
        b = jax.random.uniform(kb, (fan_out,), jnp.float32, -bound, bound)
        params["decoder"].append((w, b))

    return params


def ae_reference(params, x):
    """Pure-JAX reference for correctness checking."""
    h = x
    for w, b in params["encoder"] + params["decoder"]:
        z = h @ w + b
        h = jnp.cos(z) - z
    return h


if __name__ == "__main__":
    layer_sizes = [32, 16, 8]   # encoder: 32->16->8, decoder: 8->16->32
    batch = 32                  # small; tiled into 4 grid steps of 8 rows

    key = jax.random.PRNGKey(0)
    key, kx = jax.random.split(key)
    x = jax.random.normal(kx, (batch, layer_sizes[0]), jnp.float32)

    params = init_ae_params(layer_sizes, key)

    # Small batch_tile here to exercise the multi-step (parallel) grid path.
    out = ae_forward(params, x, batch_tile=8)
    out = jax.block_until_ready(out)

    ref = ae_reference(params, x)
    assert out.shape == (batch, layer_sizes[0])
    assert jnp.allclose(out, ref, atol=1e-5, rtol=1e-5), "mismatch vs reference"

    print("KERNEL_OK")
</pallas_src>

<mosaic_0001>
module attributes {stable_mosaic.version = 11 : i64} {
  func.func @kernel(%arg0: i32, %arg1: memref<8x32xf32, #tpu.memory_space<vmem>>, %arg2: memref<32x16xf32, #tpu.memory_space<vmem>>, %arg3: memref<16x8xf32, #tpu.memory_space<vmem>>, %arg4: memref<8x16xf32, #tpu.memory_space<vmem>>, %arg5: memref<16x32xf32, #tpu.memory_space<vmem>>, %arg6: memref<1x72xf32, #tpu.memory_space<vmem>>, %arg7: memref<8x32xf32, #tpu.memory_space<vmem>>) attributes {dimension_semantics = [#tpu.dimension_semantics<parallel>], iteration_bounds = array<i64: 4>, scalar_prefetch = 0 : i64, scratch_operands = 0 : i64, tpu.core_type = #tpu.core_type<tc>, window_params = [{transform_indices = @transform_0, window_bounds = array<i64: 8, 32>}, {pipeline_mode = #tpu.pipeline_mode<synchronous>, transform_indices = @transform_1, window_bounds = array<i64: 32, 16>}, {pipeline_mode = #tpu.pipeline_mode<synchronous>, transform_indices = @transform_2, window_bounds = array<i64: 16, 8>}, {pipeline_mode = #tpu.pipeline_mode<synchronous>, transform_indices = @transform_3, window_bounds = array<i64: 8, 16>}, {pipeline_mode = #tpu.pipeline_mode<synchronous>, transform_indices = @transform_4, window_bounds = array<i64: 16, 32>}, {pipeline_mode = #tpu.pipeline_mode<synchronous>, transform_indices = @transform_5, window_bounds = array<i64: 1, 72>}, {transform_indices = @transform_6, window_bounds = array<i64: 8, 32>}]} {
    %c0 = arith.constant 0 : index
    %c0_0 = arith.constant 0 : index
    %0 = vector.load %arg1[%c0, %c0_0] : memref<8x32xf32, #tpu.memory_space<vmem>>, vector<8x32xf32>
    %c0_1 = arith.constant 0 : index
    %c0_2 = arith.constant 0 : index
    %1 = vector.load %arg2[%c0_1, %c0_2] : memref<32x16xf32, #tpu.memory_space<vmem>>, vector<32x16xf32>
    %cst = arith.constant dense<0.000000e+00> : vector<8x16xf32>
    %2 = tpu.matmul %0, %1, %cst {dimension_numbers = #tpu.dot_dimension_numbers<[1], [0], [0], [1], [0, 0, 1, 1], [], []>} : vector<8x32xf32>, vector<32x16xf32>, vector<8x16xf32> -> vector<8x16xf32>
    %c0_3 = arith.constant 0 : index
    %c0_4 = arith.constant 0 : index
    %3 = vector.load %arg6[%c0_3, %c0_4] : memref<1x72xf32, #tpu.memory_space<vmem>>, vector<1x16xf32>
    %4 = vector.broadcast %3 : vector<1x16xf32> to vector<8x16xf32>
    %5 = arith.addf %2, %4 : vector<8x16xf32>
    %6 = math.cos %5 : vector<8x16xf32>
    %7 = arith.subf %6, %5 : vector<8x16xf32>
    %c0_5 = arith.constant 0 : index
    %c0_6 = arith.constant 0 : index
    %8 = vector.load %arg3[%c0_5, %c0_6] : memref<16x8xf32, #tpu.memory_space<vmem>>, vector<16x8xf32>
    %cst_7 = arith.constant dense<0.000000e+00> : vector<8x8xf32>
    %9 = tpu.matmul %7, %8, %cst_7 {dimension_numbers = #tpu.dot_dimension_numbers<[1], [0], [0], [1], [0, 0, 1, 1], [], []>} : vector<8x16xf32>, vector<16x8xf32>, vector<8x8xf32> -> vector<8x8xf32>
    %c0_8 = arith.constant 0 : index
    %c16 = arith.constant 16 : index
    %10 = vector.load %arg6[%c0_8, %c16] : memref<1x72xf32, #tpu.memory_space<vmem>>, vector<1x8xf32>
    %11 = vector.broadcast %10 : vector<1x8xf32> to vector<8x8xf32>
    %12 = arith.addf %9, %11 : vector<8x8xf32>
    %13 = math.cos %12 : vector<8x8xf32>
    %14 = arith.subf %13, %12 : vector<8x8xf32>
    %c0_9 = arith.constant 0 : index
    %c0_10 = arith.constant 0 : index
    %15 = vector.load %arg4[%c0_9, %c0_10] : memref<8x16xf32, #tpu.memory_space<vmem>>, vector<8x16xf32>
    %cst_11 = arith.constant dense<0.000000e+00> : vector<8x16xf32>
    %16 = tpu.matmul %14, %15, %cst_11 {dimension_numbers = #tpu.dot_dimension_numbers<[1], [0], [0], [1], [0, 0, 1, 1], [], []>} : vector<8x8xf32>, vector<8x16xf32>, vector<8x16xf32> -> vector<8x16xf32>
    %c0_12 = arith.constant 0 : index
    %c24 = arith.constant 24 : index
    %17 = vector.load %arg6[%c0_12, %c24] : memref<1x72xf32, #tpu.memory_space<vmem>>, vector<1x16xf32>
    %18 = vector.broadcast %17 : vector<1x16xf32> to vector<8x16xf32>
    %19 = arith.addf %16, %18 : vector<8x16xf32>
    %20 = math.cos %19 : vector<8x16xf32>
    %21 = arith.subf %20, %19 : vector<8x16xf32>
    %c0_13 = arith.constant 0 : index
    %c0_14 = arith.constant 0 : index
    %22 = vector.load %arg5[%c0_13, %c0_14] : memref<16x32xf32, #tpu.memory_space<vmem>>, vector<16x32xf32>
    %cst_15 = arith.constant dense<0.000000e+00> : vector<8x32xf32>
    %23 = tpu.matmul %21, %22, %cst_15 {dimension_numbers = #tpu.dot_dimension_numbers<[1], [0], [0], [1], [0, 0, 1, 1], [], []>} : vector<8x16xf32>, vector<16x32xf32>, vector<8x32xf32> -> vector<8x32xf32>
    %c0_16 = arith.constant 0 : index
    %c40 = arith.constant 40 : index
    %24 = vector.load %arg6[%c0_16, %c40] : memref<1x72xf32, #tpu.memory_space<vmem>>, vector<1x32xf32>
    %25 = vector.broadcast %24 : vector<1x32xf32> to vector<8x32xf32>
    %26 = arith.addf %23, %25 : vector<8x32xf32>
    %27 = math.cos %26 : vector<8x32xf32>
    %28 = arith.subf %27, %26 : vector<8x32xf32>
    %c0_17 = arith.constant 0 : index
    %c0_18 = arith.constant 0 : index
    %29 = vector.load %arg7[%c0_17, %c0_18] : memref<8x32xf32, #tpu.memory_space<vmem>>, vector<8x32xf32>
    tpu.vector_store %arg7[%c0_17, %c0_18], %28 {strides = array<i32>} : memref<8x32xf32, #tpu.memory_space<vmem>>, vector<8x32xf32>,
    return
  }
  func.func @transform_0(%arg0: i32) -> (i32, i32) {
    %c0_i32 = arith.constant 0 : i32
    %c0_i32_0 = arith.constant 0 : i32
    return %arg0, %c0_i32 : i32, i32
  }
  func.func @transform_1(%arg0: i32) -> (i32, i32) {
    %c0_i32 = arith.constant 0 : i32
    %c0_i32_0 = arith.constant 0 : i32
    %c0_i32_1 = arith.constant 0 : i32
    return %c0_i32, %c0_i32_0 : i32, i32
  }
  func.func @transform_2(%arg0: i32) -> (i32, i32) {
    %c0_i32 = arith.constant 0 : i32
    %c0_i32_0 = arith.constant 0 : i32
    %c0_i32_1 = arith.constant 0 : i32
    return %c0_i32, %c0_i32_0 : i32, i32
  }
  func.func @transform_3(%arg0: i32) -> (i32, i32) {
    %c0_i32 = arith.constant 0 : i32
    %c0_i32_0 = arith.constant 0 : i32
    %c0_i32_1 = arith.constant 0 : i32
    return %c0_i32, %c0_i32_0 : i32, i32
  }
  func.func @transform_4(%arg0: i32) -> (i32, i32) {
    %c0_i32 = arith.constant 0 : i32
    %c0_i32_0 = arith.constant 0 : i32
    %c0_i32_1 = arith.constant 0 : i32
    return %c0_i32, %c0_i32_0 : i32, i32
  }
  func.func @transform_5(%arg0: i32) -> (i32, i32) {
    %c0_i32 = arith.constant 0 : i32
    %c0_i32_0 = arith.constant 0 : i32
    %c0_i32_1 = arith.constant 0 : i32
    return %c0_i32, %c0_i32_0 : i32, i32
  }
  func.func @transform_6(%arg0: i32) -> (i32, i32) {
    %c0_i32 = arith.constant 0 : i32
    %c0_i32_0 = arith.constant 0 : i32
    return %arg0, %c0_i32 : i32, i32
  }
}

</mosaic_0001>

<llo_original>
// kernel: tpu_custom_call.1
$region0: #{tpu_custom_call.1}
  #allocation0 [shape = 'u32[]', space=smem, size = 0x4, offset = 0x4, fixed_abs, tag = 'smem constant byte address 0x4 - core index']
  #allocation1 [shape = 'u32[144,128]{1,0:T(1,128)}', space=vmem, size = 0x12000, scoped, tag = 'internal scratch']
  %s0 = inlined_call_operand.vmem [shape: f32[32,32], index: 0, kind: input, shape index: {}]
  %s1 = inlined_call_operand.vmem [shape: f32[32,16], index: 1, kind: input, shape index: {}]
  %s2 = inlined_call_operand.vmem [shape: f32[16,8], index: 2, kind: input, shape index: {}]
  %s3 = inlined_call_operand.vmem [shape: f32[8,16], index: 3, kind: input, shape index: {}]
  %s4 = inlined_call_operand.vmem [shape: f32[16,32], index: 4, kind: input, shape index: {}]
  %s5 = inlined_call_operand.vmem [shape: f32[1,72], index: 5, kind: input, shape index: {}]
  %s6 = inlined_call_operand.hbm [shape: f32[32,32], index: 6, kind: output, shape index: {}]
  %s7 = sld [smem:[#allocation0]]
  $region57: #{tpu_custom_call.1} parent=0
    _
  %s9 = ssub.s32 1, %s7
  %s10 = scalar_select 0, %s9, %s7
  $region1: #{tpu_custom_call.1} parent=0
    #allocation2 [shape = 'u8[8192]{0}', space=vmem, size = 0x2000, scoped, tag = 'output window, operand 0']
    #allocation3 [shape = 's32[2]{0}', space=sflag, size = 0x8, scoped, tag = 'scoped memory for tpu_custom_call.1']
    %11 = vsyncpa [#allocation3], 0
    %s12 = scalar_lea.sflag [#allocation3], 1
    %13 = vsyncpa %s12, 0
    loop: start=0, step=1, limit=6
    $region2: #{tpu_custom_call.1} parent=1 // loop_pre_header
      _
    $region3: #{tpu_custom_call.1} parent=1 // loop_header
      %s15 = sphi 0, %s19
      %p16 = scmp.ge.s32.totalorder %s15, 6
      %s25 = sphi 0, %s27
      %s28 = sphi 0, %s25
      %s29 = sphi 0, %s28
      %s45 = sphi 0, %s29
      %s49 = sphi 0, %s49
      %s51 = sphi 0, %s49
      %s52 = sphi 0, %s51
      %s66 = sphi 0, %s52
      %s70 = sphi 0, %s70
      %s72 = sphi 0, %s70
      %s73 = sphi 0, %s72
      %s87 = sphi 0, %s73
      %s91 = sphi 0, %s91
      %s93 = sphi 0, %s91
      %s94 = sphi 0, %s93
      %s108 = sphi 0, %s94
      %s112 = sphi 0, %s112
      %s114 = sphi 0, %s112
      %s115 = sphi 0, %s114
      %s129 = sphi 0, %s115
      %s133 = sphi 0, %s133
      %s135 = sphi 0, %s133
      %s136 = sphi 0, %s135
      %s150 = sphi 0, %s136
      %s156 = sphi 0, %s158
      %s159 = sphi 0, %s156
      %s160 = sphi 0, %s159
      %s176 = sphi 0, %s160
    $region4: #{tpu_custom_call.1} parent=1 // loop_header_branch
      %18 = sbr.rel (%p16) target = $region8
    $region5: #{tpu_custom_call.1} parent=1 // loop_body
      %s20 = ssub.s32 %s15, 1
      %s21 = ssub.s32 %s15, 2
      %s22 = sadd.s32 %s15, 1
      %s23 = ssub.s32 %s15, %s22
      %p24 = scmp.eq.s32.totalorder %s23, 0
      %s26 = sadd.s32 %s25, 1
      %s27 = scalar_select %p24, %s25, %s26
      %p30 = pneg %p24
      %p31 = scmp.eq.s32.totalorder %s15, 3
      %p32 = por %p30, %p31
      %p33 = scmp.ne.s32.totalorder %s25, %s28
      %p34 = scmp.eq.s32.totalorder %s15, 0
      %p35 = por %p33, %p34
      %p36 = scmp.ne.s32.totalorder %s25, %s28
      %p37 = scmp.eq.s32.totalorder %s20, 3
      %p38 = por %p36, %p37
      %p39 = scmp.ne.s32.totalorder %s28, %s29
      %p40 = scmp.eq.s32.totalorder %s20, 0
      %p41 = por %p39, %p40
      %p42 = scmp.ne.s32.totalorder %s28, %s29
      %p43 = scmp.eq.s32.totalorder %s21, 3
      %p44 = por %p42, %p43
      %p46 = scmp.ne.s32.totalorder %s29, %s45
      %p47 = scmp.eq.s32.totalorder %s21, 0
      %p48 = por %p46, %p47
      %s50 = sadd.s32 %s49, 1
      %p53 = scmp.eq.s32.totalorder %s15, 3
      %p54 = scmp.ne.s32.totalorder %s49, %s51
      %p55 = scmp.eq.s32.totalorder %s15, 0
      %p56 = por %p54, %p55
      %p57 = scmp.ne.s32.totalorder %s49, %s51
      %p58 = scmp.eq.s32.totalorder %s20, 3
      %p59 = por %p57, %p58
      %p60 = scmp.ne.s32.totalorder %s51, %s52
      %p61 = scmp.eq.s32.totalorder %s20, 0
      %p62 = por %p60, %p61
      %p63 = scmp.ne.s32.totalorder %s51, %s52
      %p64 = scmp.eq.s32.totalorder %s21, 3
      %p65 = por %p63, %p64
      %p67 = scmp.ne.s32.totalorder %s52, %s66
      %p68 = scmp.eq.s32.totalorder %s21, 0
      %p69 = por %p67, %p68
      %s71 = sadd.s32 %s70, 1
      %p74 = scmp.eq.s32.totalorder %s15, 3
      %p75 = scmp.ne.s32.totalorder %s70, %s72
      %p76 = scmp.eq.s32.totalorder %s15, 0
      %p77 = por %p75, %p76
      %p78 = scmp.ne.s32.totalorder %s70, %s72
      %p79 = scmp.eq.s32.totalorder %s20, 3
      %p80 = por %p78, %p79
      %p81 = scmp.ne.s32.totalorder %s72, %s73
      %p82 = scmp.eq.s32.totalorder %s20, 0
      %p83 = por %p81, %p82
      %p84 = scmp.ne.s32.totalorder %s72, %s73
      %p85 = scmp.eq.s32.totalorder %s21, 3
      %p86 = por %p84, %p85
      %p88 = scmp.ne.s32.totalorder %s73, %s87
      %p89 = scmp.eq.s32.totalorder %s21, 0
      %p90 = por %p88, %p89
      %s92 = sadd.s32 %s91, 1
      %p95 = scmp.eq.s32.totalorder %s15, 3
      %p96 = scmp.ne.s32.totalorder %s91, %s93
      %p97 = scmp.eq.s32.totalorder %s15, 0
      %p98 = por %p96, %p97
      %p99 = scmp.ne.s32.totalorder %s91, %s93
      %p100 = scmp.eq.s32.totalorder %s20, 3
      %p101 = por %p99, %p100
      %p102 = scmp.ne.s32.totalorder %s93, %s94
      %p103 = scmp.eq.s32.totalorder %s20, 0
      %p104 = por %p102, %p103
      %p105 = scmp.ne.s32.totalorder %s93, %s94
      %p106 = scmp.eq.s32.totalorder %s21, 3
      %p107 = por %p105, %p106
      %p109 = scmp.ne.s32.totalorder %s94, %s108
      %p110 = scmp.eq.s32.totalorder %s21, 0
      %p111 = por %p109, %p110
      %s113 = sadd.s32 %s112, 1
      %p116 = scmp.eq.s32.totalorder %s15, 3
      %p117 = scmp.ne.s32.totalorder %s112, %s114
      %p118 = scmp.eq.s32.totalorder %s15, 0
      %p119 = por %p117, %p118
      %p120 = scmp.ne.s32.totalorder %s112, %s114
      %p121 = scmp.eq.s32.totalorder %s20, 3
      %p122 = por %p120, %p121
      %p123 = scmp.ne.s32.totalorder %s114, %s115
      %p124 = scmp.eq.s32.totalorder %s20, 0
      %p125 = por %p123, %p124
      %p126 = scmp.ne.s32.totalorder %s114, %s115
      %p127 = scmp.eq.s32.totalorder %s21, 3
      %p128 = por %p126, %p127
      %p130 = scmp.ne.s32.totalorder %s115, %s129
      %p131 = scmp.eq.s32.totalorder %s21, 0
      %p132 = por %p130, %p131
      %s134 = sadd.s32 %s133, 1
      %p137 = scmp.eq.s32.totalorder %s15, 3
      %p138 = scmp.ne.s32.totalorder %s133, %s135
      %p139 = scmp.eq.s32.totalorder %s15, 0
      %p140 = por %p138, %p139
      %p141 = scmp.ne.s32.totalorder %s133, %s135
      %p142 = scmp.eq.s32.totalorder %s20, 3
      %p143 = por %p141, %p142
      %p144 = scmp.ne.s32.totalorder %s135, %s136
      %p145 = scmp.eq.s32.totalorder %s20, 0
      %p146 = por %p144, %p145
      %p147 = scmp.ne.s32.totalorder %s135, %s136
      %p148 = scmp.eq.s32.totalorder %s21, 3
      %p149 = por %p147, %p148
      %p151 = scmp.ne.s32.totalorder %s136, %s150
      %p152 = scmp.eq.s32.totalorder %s21, 0
      %p153 = por %p151, %p152
      %s154 = ssub.s32 %s15, %s22
      %p155 = scmp.eq.s32.totalorder %s154, 0
      %s157 = sadd.s32 %s156, 1
      %s158 = scalar_select %p155, %s156, %s157
      %p161 = pneg %p155
      %p162 = scmp.eq.s32.totalorder %s15, 3
      %p163 = por %p161, %p162
      %p164 = scmp.ne.s32.totalorder %s156, %s159
      %p165 = scmp.eq.s32.totalorder %s15, 0
      %p166 = por %p164, %p165
      %p167 = scmp.ne.s32.totalorder %s156, %s159
      %p168 = scmp.eq.s32.totalorder %s20, 3
      %p169 = por %p167, %p168
      %p170 = scmp.ne.s32.totalorder %s159, %s160
      %p171 = scmp.eq.s32.totalorder %s20, 0
      %p172 = por %p170, %p171
      %p173 = scmp.ne.s32.totalorder %s159, %s160
      %p174 = scmp.eq.s32.totalorder %s21, 3
      %p175 = por %p173, %p174
      %p177 = scmp.ne.s32.totalorder %s160, %s176
      %p178 = scmp.eq.s32.totalorder %s21, 0
      %p179 = por %p177, %p178
      %p180 = scmp.le.s32.totalorder 1, %s15
      %p181 = scmp.lt.s32.totalorder %s15, 5
      %p182 = pnand %p180, %p181
      %p183 = pneg %p182
      // Predicated region
      $region9: #{tpu_custom_call.1} parent=5 // pred_check
        _
      $region10: #{tpu_custom_call.1} parent=5 // pred_check_branch
        %185 = sbr.rel (%p182) target = $region12
      $region11: #{tpu_custom_call.1} parent=5 // pred_region
        %s186 = ssub.s32 %s15, 1
        // Predicated region
        $region13: #{tpu_custom_call.1} parent=11 // pred_check
          %p187 = pneg %p62
        $region14: #{tpu_custom_call.1} parent=11 // pred_check_branch
          %189 = sbr.rel (%p187) target = $region16
        $region15: #{tpu_custom_call.1} parent=11 // pred_region
          _
        $region16: #{tpu_custom_call.1} parent=11 // pred_fallthru
          _
        // Predicated region
        $region17: #{tpu_custom_call.1} parent=11 // pred_check
          %p190 = pneg %p83
        $region18: #{tpu_custom_call.1} parent=11 // pred_check_branch
          %192 = sbr.rel (%p190) target = $region20
        $region19: #{tpu_custom_call.1} parent=11 // pred_region
          _
        $region20: #{tpu_custom_call.1} parent=11 // pred_fallthru
          _
        // Predicated region
        $region21: #{tpu_custom_call.1} parent=11 // pred_check
          %p193 = pneg %p104
        $region22: #{tpu_custom_call.1} parent=11 // pred_check_branch
          %195 = sbr.rel (%p193) target = $region24
        $region23: #{tpu_custom_call.1} parent=11 // pred_region
          _
        $region24: #{tpu_custom_call.1} parent=11 // pred_fallthru
          _
        // Predicated region
        $region25: #{tpu_custom_call.1} parent=11 // pred_check
          %p196 = pneg %p125
        $region26: #{tpu_custom_call.1} parent=11 // pred_check_branch
          %198 = sbr.rel (%p196) target = $region28
        $region27: #{tpu_custom_call.1} parent=11 // pred_region
          _
        $region28: #{tpu_custom_call.1} parent=11 // pred_fallthru
          _
        // Predicated region
        $region29: #{tpu_custom_call.1} parent=11 // pred_check
          %p199 = pneg %p146
        $region30: #{tpu_custom_call.1} parent=11 // pred_check_branch
          %201 = sbr.rel (%p199) target = $region32
        $region31: #{tpu_custom_call.1} parent=11 // pred_region
          _
        $region32: #{tpu_custom_call.1} parent=11 // pred_fallthru
          _
      $region12: #{tpu_custom_call.1} parent=5 // pred_fallthru
        _
      %p202 = scmp.lt.s32.totalorder %s15, 4
      // Predicated region
      $region33: #{tpu_custom_call.1} parent=5 // pred_check
        %p203 = pneg %p202
      $region34: #{tpu_custom_call.1} parent=5 // pred_check_branch
        %205 = sbr.rel (%p203) target = $region36
      $region35: #{tpu_custom_call.1} parent=5 // pred_region
        // Predicated region
        $region37: #{tpu_custom_call.1} parent=35 // pred_check
          %p206 = pneg %p35
        $region38: #{tpu_custom_call.1} parent=35 // pred_check_branch
          %208 = sbr.rel (%p206) target = $region40
        $region39: #{tpu_custom_call.1} parent=35 // pred_region
          %p209 = scmp.lt.s32.totalorder %s15, 3
          %s210 = scalar_select %p209, %s15, 3
          %s211 = smul.addr %s210, 8
          %s212 = scalar_lea.vmem %s0, %s211
        $region40: #{tpu_custom_call.1} parent=35 // pred_fallthru
          _
      $region36: #{tpu_custom_call.1} parent=5 // pred_fallthru
        _
      %p213 = scmp.le.s32.totalorder 1, %s15
      %p214 = scmp.lt.s32.totalorder %s15, 5
      %p215 = pnand %p213, %p214
      %p216 = pneg %p215
      // Predicated region
      $region41: #{tpu_custom_call.1} parent=5 // pred_check
        _
      $region42: #{tpu_custom_call.1} parent=5 // pred_check_branch
        %218 = sbr.rel (%p215) target = $region44
      $region43: #{tpu_custom_call.1} parent=5 // pred_region
        %s219 = ssub.s32 %s15, 1
        %p220 = scmp.lt.s32.totalorder %s20, 3
        %s221 = scalar_select %p220, %s20, 3
        %s222 = smul.addr %s221, 8
        %s223 = scalar_lea.vmem %s0, %s222
        %p224 = pneg %p41
        %p225 = pneg %p38
        %p226 = pneg %p62
        %p227 = pneg %p59
        %p228 = pneg %p83
        %p229 = pneg %p80
        %p230 = pneg %p104
        %p231 = pneg %p101
        %p232 = pneg %p125
        %p233 = pneg %p122
        %p234 = pneg %p146
        %p235 = pneg %p143
        %p236 = pneg %p172
        %p237 = pneg %p169
        %s238 = sand.u32 %s159, 1
        %s239 = scalar_lea.sflag [#allocation3], %s238
        %s240 = sand.u32 %s159, 1
        %s241 = smul.addr %s240, 8
        %s242 = scalar_lea.vmem [#allocation2], %s241
        %p243 = scmp.lt.s32.totalorder %s20, 3
        %s244 = scalar_select %p243, %s20, 3
        %s245 = smul.addr %s244, 8
        %s246 = scalar_lea.vmem %s0, %s245
        %v247 = vld [vmem:[%s246] sm:$0xff]
        %v248 = vld [vmem:[%s1] sm:$0xff]
        %v249 = vld [vmem:[%s1 + $0x8] sm:$0xff]
        %v250 = vld [vmem:[%s1 + $0x10] sm:$0xff]
        %v251 = vld [vmem:[%s1 + $0x18] sm:$0xff]
        %v252 = vld [vmem:[%s5] sm:$0x1]
        %v254 = vlaneseq
        %v255 = vshrl.u32 %v254, 7
        %v256 = vsub.s32 0, %v255
        %v257 = vrot.slane %v252, %v256
        %vm259 = vcmask 261120
        %v261 = vsel %vm259, %v247, 0
        %263 = vmatprep.subr.mxu0 0.0
        %264 = vmatpush1.msra.mxu0 0.0
        %265 = vmatprep.subr.mxu0 0.0
        %266 = vmatpush1.msra.mxu0 0.0
        %267 = vmatprep.subr.mxu0 0.0
        %268 = vmatpush1.msra.mxu0 0.0
        %269 = vmatprep.subr.mxu0 0.0
        %270 = vmatpush1.msra.mxu0 0.0
        %271 = vmatprep.subr.mxu0 0.0
        %272 = vmatpush1.msra.mxu0 0.0
        %273 = vmatprep.subr.mxu0 0.0
        %274 = vmatpush1.msra.mxu0 0.0
        %275 = vmatprep.subr.mxu0 0.0
        %276 = vmatpush1.msra.mxu0 0.0
        %277 = vmatprep.subr.mxu0 0.0
        %278 = vmatpush1.msra.mxu0 0.0
        %279 = vmatprep.subr.mxu0 0.0
        %280 = vmatpush1.msra.mxu0 0.0
        %281 = vmatprep.subr.mxu0 0.0
        %282 = vmatpush1.msra.mxu0 0.0
        %283 = vmatprep.subr.mxu0 0.0
        %284 = vmatpush1.msra.mxu0 0.0
        %285 = vmatprep.subr.mxu0 0.0
        %286 = vmatpush1.msra.mxu0 0.0
        %287 = vmatprep.subr.mxu0 0.0
        %288 = vmatpush1.msra.mxu0 %v251
        %289 = vmatprep.subr.mxu0 0.0
        %290 = vmatpush1.msra.mxu0 %v250
        %291 = vmatprep.subr.mxu0 0.0
        %292 = vmatpush1.msra.mxu0 %v249
        %293 = vmatprep.subr.mxu0 0.0
        %294 = vmatpush1.msra.mxu0 %v248
        %295 = vmatprep.subr.mxu0 0.0
        %296 = vmatpush2.msra.mxu0 0.0
        %297 = vmatprep.subr.mxu0 0.0
        %298 = vmatpush2.msra.mxu0 0.0
        %299 = vmatprep.subr.mxu0 0.0
        %300 = vmatpush2.msra.mxu0 0.0
        %301 = vmatprep.subr.mxu0 0.0
        %302 = vmatpush2.msra.mxu0 0.0
        %303 = vmatprep.subr.mxu0 0.0
        %304 = vmatpush2.msra.mxu0 0.0
        %305 = vmatprep.subr.mxu0 0.0
        %306 = vmatpush2.msra.mxu0 0.0
        %307 = vmatprep.subr.mxu0 0.0
        %308 = vmatpush2.msra.mxu0 0.0
        %309 = vmatprep.subr.mxu0 0.0
        %310 = vmatpush2.msra.mxu0 0.0
        %311 = vmatprep.subr.mxu0 0.0
        %312 = vmatpush2.msra.mxu0 0.0
        %313 = vmatprep.subr.mxu0 0.0
        %314 = vmatpush2.msra.mxu0 0.0
        %315 = vmatprep.subr.mxu0 0.0
        %316 = vmatpush2.msra.mxu0 0.0
        %317 = vmatprep.subr.mxu0 0.0
        %318 = vmatpush2.msra.mxu0 0.0
        %319 = vmatprep.subr.mxu0 0.0
        %320 = vmatpush2.msra.mxu0 0.0
        %321 = vmatprep.subr.mxu0 0.0
        %322 = vmatpush2.msra.mxu0 0.0
        %323 = vmatprep.subr.mxu0 0.0
        %324 = vmatpush2.msra.mxu0 0.0
        %325 = vmatprep.subr.mxu0 0.0
        %326 = vmatpush2.msra.mxu0 0.0
        %327 = vmatprep.mubr.f32.mxu0 0.0
        %328 = vmatmul.mubr.f32.gmra.mxu0 %v261
        %v329 = vpop.f32.mrf.mxu0
        %v330 = vadd.f32 %v257, %v329
        %v331 = vpop.f32.mrf.mxu0
        %332 = vdwg.mxu0
        %v333 = vand.u32 2147483647, %v330
        %vm334 = vcmp.le.f32.partialorder %v333, 0.7853982
        %vm335 = vcmp.lt.s32.totalorder %v330, 0
        %v336 = vand.u32 %v330, 2139095040
        %v337 = vshrl.u32 %v336, 23
        %v338 = vsub.s32 %v337, 127
        %v339 = vand.u32 2147483647, %v330
        %v340 = vand.u32 %v339, 8388607
        %v341 = vor.u32 %v340, 8388608
        %v342 = vsub.s32 0, %v341
        %v343 = vadd.s32 %v338, 1
        %vm344 = vcmp.gt.s32.totalorder %v343, 0
        %v345 = vsel %vm344, %v343, 0
        %v346 = vshrl.u32 %v345, 5
        %v347 = vand.u32 %v345, 31
        %v348 = vsub.s32 32, %v347
        %v349 = vshrl.u32 683565275, %v348
        %v350 = vshll.u32 683565275, %v347
        %v351 = vshrl.u32 2475754826, %v348
        %v352 = vor.u32 %v350, %v351
        %v353 = vshll.u32 2475754826, %v347
        %v354 = vshrl.u32 2131351028, %v348
        %v355 = vor.u32 %v353, %v354
        %v356 = vshll.u32 2131351028, %v347
        %v357 = vshrl.u32 2102212464, %v348
        %v358 = vor.u32 %v356, %v357
        %v359 = vshll.u32 2102212464, %v347
        %v360 = vshrl.u32 920167782, %v348
        %v361 = vor.u32 %v359, %v360
        %v362 = vshll.u32 920167782, %v347
        %v363 = vshrl.u32 1326507024, %v348
        %v364 = vor.u32 %v362, %v363
        %vm365 = vcmp.lt.s32.totalorder %v346, 1
        %vm366 = vcmp.lt.s32.totalorder %v346, 2
        %vm367 = vcmp.lt.s32.totalorder %v346, 3
        %vm368 = vcmp.lt.s32.totalorder %v346, 4
        %v369 = vsel %vm365, %v349, %v352
        %v370 = vsel %vm368, %v358, 2102212464
        %v371 = vsel %vm367, %v355, %v370
        %v372 = vsel %vm366, %v369, %v371
        %v373 = vsel %vm365, %v352, %v355
        %v374 = vsel %vm368, %v361, 920167782
        %v375 = vsel %vm367, %v358, %v374
        %v376 = vsel %vm366, %v373, %v375
        %v377 = vsel %vm365, %v355, %v358
        %v378 = vsel %vm368, %v364, 1326507024
        %v379 = vsel %vm367, %v361, %v378
        %v380 = vsel %vm366, %v377, %v379
        %v381 = vshll.u32 %v341, 8
        %v382 = vmul.u32.u64.compose %v381, %v380
        %v383 = vextract.low.u32 %v382
        %v384 = vextract.high.u32 %v382
        %v385 = vmul.u32.u64.compose %v381, %v376
        %v386 = vextract.low.u32 %v385
        %v387 = vextract.high.u32 %v385
        %v388 = vmul.u32 %v381, %v372
        %v389 = vadd.s32 %v384, %v386
        %vm390 = vc.u32 %v384, %v386
        %v391 = vadd.s32 %v387, 1
        %v392 = vsel %vm390, %v391, %v387
        %v393 = vadd.s32 %v388, %v392
        %v394 = vadd.s32 %v393, 536870912
        %v395 = vshrl.u32 %v394, 30
        %v396 = vshll.u32 %v395, 30
        %v397 = vsub.s32 %v393, %v396
        %vm398 = vcmp.lt.s32.totalorder %v397, 0
        %v399 = vsub.s32 0, %v397
        %v400 = vsel %vm398, %v399, %v397
        %v401 = vclz %v400
        %v402 = vsub.s32 %v401, 2
        %vm403 = vcmp.gt.s32.totalorder 0, %v402
        %v404 = vsel %vm403, 0, %v402
        %v405 = vsub.s32 32, %v404
        %v406 = vshll.u32 %v397, %v404
        %v407 = vshrl.u32 %v389, %v405
        %v408 = vor.u32 %v406, %v407
        %v409 = vsub.s32 4294967266, %v404
        %v410 = vadd.s32 %v409, 127
        %v411 = vshll.u32 %v410, 23
        %v412 = vor.u32 4788187, %v411
        %v413 = vand.u32 2147483647, %v412
        %v415 = vcvt.s32.f32 %v408
        %v416 = vmul.f32 %v415, %v413
        %v417 = vxor.u32 %v416, 2147483648
        %v418 = vsel %vm335, %v417, %v416
        %v419 = vsub.s32 4, %v395
        %v420 = vsel %vm335, %v419, %v395
        %v421 = vsel %vm334, %v330, %v418
        %v422 = vsel %vm334, 0, %v420
        %v423 = vcosq.f32.pop %v421
        %v424 = vsinq.f32.pop %v421
        %vm425 = vweird.f32 %v330
        %v426 = vand.u32 %v422, 3
        %vm427 = vcmp.lt.s32.totalorder %v426, 2
        %vm428 = vcmp.eq.s32.totalorder %v426, 0
        %v429 = vxor.u32 %v424, 2147483648
        %v430 = vsel %vm428, %v423, %v429
        %vm431 = vcmp.eq.s32.totalorder %v426, 2
        %v432 = vxor.u32 %v423, 2147483648
        %v433 = vsel %vm431, %v432, %v424
        %v434 = vsel %vm427, %v430, %v433
        %v435 = vsel %vm425, nan, %v434
        %v436 = vsub.f32 %v435, %v330
        %v437 = vld [vmem:[%s2] sm:$0xff]
        %v438 = vld [vmem:[%s2 + $0x8] sm:$0xff]
        %439 = vrot.lane.b32.xlu0 %v257, 112
        %v440 = vpop.permute.xlu0 %439
        %vm442 = vcmask 130048
        %v444 = vsel %vm442, %v436, 0
        %446 = vmatprep.subr.mxu0 0.0
        %447 = vmatpush1.msra.mxu0 0.0
        %448 = vmatprep.subr.mxu0 0.0
        %449 = vmatpush1.msra.mxu0 0.0
        %450 = vmatprep.subr.mxu0 0.0
        %451 = vmatpush1.msra.mxu0 0.0
        %452 = vmatprep.subr.mxu0 0.0
        %453 = vmatpush1.msra.mxu0 0.0
        %454 = vmatprep.subr.mxu0 0.0
        %455 = vmatpush1.msra.mxu0 0.0
        %456 = vmatprep.subr.mxu0 0.0
        %457 = vmatpush1.msra.mxu0 0.0
        %458 = vmatprep.subr.mxu0 0.0
        %459 = vmatpush1.msra.mxu0 0.0
        %460 = vmatprep.subr.mxu0 0.0
        %461 = vmatpush1.msra.mxu0 0.0
        %462 = vmatprep.subr.mxu0 0.0
        %463 = vmatpush1.msra.mxu0 0.0
        %464 = vmatprep.subr.mxu0 0.0
        %465 = vmatpush1.msra.mxu0 0.0
        %466 = vmatprep.subr.mxu0 0.0
        %467 = vmatpush1.msra.mxu0 0.0
        %468 = vmatprep.subr.mxu0 0.0
        %469 = vmatpush1.msra.mxu0 0.0
        %470 = vmatprep.subr.mxu0 0.0
        %471 = vmatpush1.msra.mxu0 0.0
        %472 = vmatprep.subr.mxu0 0.0
        %473 = vmatpush1.msra.mxu0 0.0
        %474 = vmatprep.subr.mxu0 0.0
        %475 = vmatpush1.msra.mxu0 %v438
        %476 = vmatprep.subr.mxu0 0.0
        %477 = vmatpush1.msra.mxu0 %v437
        %478 = vmatprep.subr.mxu0 0.0
        %479 = vmatpush2.msra.mxu0 0.0
        %480 = vmatprep.subr.mxu0 0.0
        %481 = vmatpush2.msra.mxu0 0.0
        %482 = vmatprep.subr.mxu0 0.0
        %483 = vmatpush2.msra.mxu0 0.0
        %484 = vmatprep.subr.mxu0 0.0
        %485 = vmatpush2.msra.mxu0 0.0
        %486 = vmatprep.subr.mxu0 0.0
        %487 = vmatpush2.msra.mxu0 0.0
        %488 = vmatprep.subr.mxu0 0.0
        %489 = vmatpush2.msra.mxu0 0.0
        %490 = vmatprep.subr.mxu0 0.0
        %491 = vmatpush2.msra.mxu0 0.0
        %492 = vmatprep.subr.mxu0 0.0
        %493 = vmatpush2.msra.mxu0 0.0
        %494 = vmatprep.subr.mxu0 0.0
        %495 = vmatpush2.msra.mxu0 0.0
        %496 = vmatprep.subr.mxu0 0.0
        %497 = vmatpush2.msra.mxu0 0.0
        %498 = vmatprep.subr.mxu0 0.0
        %499 = vmatpush2.msra.mxu0 0.0
        %500 = vmatprep.subr.mxu0 0.0
        %501 = vmatpush2.msra.mxu0 0.0
        %502 = vmatprep.subr.mxu0 0.0
        %503 = vmatpush2.msra.mxu0 0.0
        %504 = vmatprep.subr.mxu0 0.0
        %505 = vmatpush2.msra.mxu0 0.0
        %506 = vmatprep.subr.mxu0 0.0
        %507 = vmatpush2.msra.mxu0 0.0
        %508 = vmatprep.subr.mxu0 0.0
        %509 = vmatpush2.msra.mxu0 0.0
        %510 = vmatprep.mubr.f32.mxu0 0.0
        %511 = vmatmul.mubr.f32.gmra.mxu0 %v444
        %v512 = vpop.f32.mrf.mxu0
        %v513 = vadd.f32 %v440, %v512
        %v514 = vpop.f32.mrf.mxu0
        %515 = vdwg.mxu0
        %v516 = vand.u32 2147483647, %v513
        %vm517 = vcmp.le.f32.partialorder %v516, 0.7853982
        %vm518 = vcmp.lt.s32.totalorder %v513, 0
        %v519 = vand.u32 %v513, 2139095040
        %v520 = vshrl.u32 %v519, 23
        %v521 = vsub.s32 %v520, 127
        %v522 = vand.u32 2147483647, %v513
        %v523 = vand.u32 %v522, 8388607
        %v524 = vor.u32 %v523, 8388608
        %v525 = vsub.s32 0, %v524
        %v526 = vadd.s32 %v521, 1
        %vm527 = vcmp.gt.s32.totalorder %v526, 0
        %v528 = vsel %vm527, %v526, 0
        %v529 = vshrl.u32 %v528, 5
        %v530 = vand.u32 %v528, 31
        %v531 = vsub.s32 32, %v530
        %v532 = vshrl.u32 683565275, %v531
        %v533 = vshll.u32 683565275, %v530
        %v534 = vshrl.u32 2475754826, %v531
        %v535 = vor.u32 %v533, %v534
        %v536 = vshll.u32 2475754826, %v530
        %v537 = vshrl.u32 2131351028, %v531
        %v538 = vor.u32 %v536, %v537
        %v539 = vshll.u32 2131351028, %v530
        %v540 = vshrl.u32 2102212464, %v531
        %v541 = vor.u32 %v539, %v540
        %v542 = vshll.u32 2102212464, %v530
        %v543 = vshrl.u32 920167782, %v531
        %v544 = vor.u32 %v542, %v543
        %v545 = vshll.u32 920167782, %v530
        %v546 = vshrl.u32 1326507024, %v531
        %v547 = vor.u32 %v545, %v546
        %vm548 = vcmp.lt.s32.totalorder %v529, 1
        %vm549 = vcmp.lt.s32.totalorder %v529, 2
        %vm550 = vcmp.lt.s32.totalorder %v529, 3
        %vm551 = vcmp.lt.s32.totalorder %v529, 4
        %v552 = vsel %vm548, %v532, %v535
        %v553 = vsel %vm551, %v541, 2102212464
        %v554 = vsel %vm550, %v538, %v553
        %v555 = vsel %vm549, %v552, %v554
        %v556 = vsel %vm548, %v535, %v538
        %v557 = vsel %vm551, %v544, 920167782
        %v558 = vsel %vm550, %v541, %v557
        %v559 = vsel %vm549, %v556, %v558
        %v560 = vsel %vm548, %v538, %v541
        %v561 = vsel %vm551, %v547, 1326507024
        %v562 = vsel %vm550, %v544, %v561
        %v563 = vsel %vm549, %v560, %v562
        %v564 = vshll.u32 %v524, 8
        %v565 = vmul.u32.u64.compose %v564, %v563
        %v566 = vextract.low.u32 %v565
        %v567 = vextract.high.u32 %v565
        %v568 = vmul.u32.u64.compose %v564, %v559
        %v569 = vextract.low.u32 %v568
        %v570 = vextract.high.u32 %v568
        %v571 = vmul.u32 %v564, %v555
        %v572 = vadd.s32 %v567, %v569
        %vm573 = vc.u32 %v567, %v569
        %v574 = vadd.s32 %v570, 1
        %v575 = vsel %vm573, %v574, %v570
        %v576 = vadd.s32 %v571, %v575
        %v577 = vadd.s32 %v576, 536870912
        %v578 = vshrl.u32 %v577, 30
        %v579 = vshll.u32 %v578, 30
        %v580 = vsub.s32 %v576, %v579
        %vm581 = vcmp.lt.s32.totalorder %v580, 0
        %v582 = vsub.s32 0, %v580
        %v583 = vsel %vm581, %v582, %v580
        %v584 = vclz %v583
        %v585 = vsub.s32 %v584, 2
        %vm586 = vcmp.gt.s32.totalorder 0, %v585
        %v587 = vsel %vm586, 0, %v585
        %v588 = vsub.s32 32, %v587
        %v589 = vshll.u32 %v580, %v587
        %v590 = vshrl.u32 %v572, %v588
        %v591 = vor.u32 %v589, %v590
        %v592 = vsub.s32 4294967266, %v587
        %v593 = vadd.s32 %v592, 127
        %v594 = vshll.u32 %v593, 23
        %v595 = vor.u32 4788187, %v594
        %v596 = vand.u32 2147483647, %v595
        %v598 = vcvt.s32.f32 %v591
        %v599 = vmul.f32 %v598, %v596
        %v600 = vxor.u32 %v599, 2147483648
        %v601 = vsel %vm518, %v600, %v599
        %v602 = vsub.s32 4, %v578
        %v603 = vsel %vm518, %v602, %v578
        %v604 = vsel %vm517, %v513, %v601
        %v605 = vsel %vm517, 0, %v603
        %v606 = vcosq.f32.pop %v604
        %v607 = vsinq.f32.pop %v604
        %vm608 = vweird.f32 %v513
        %v609 = vand.u32 %v605, 3
        %vm610 = vcmp.lt.s32.totalorder %v609, 2
        %vm611 = vcmp.eq.s32.totalorder %v609, 0
        %v612 = vxor.u32 %v607, 2147483648
        %v613 = vsel %vm611, %v606, %v612
        %vm614 = vcmp.eq.s32.totalorder %v609, 2
        %v615 = vxor.u32 %v606, 2147483648
        %v616 = vsel %vm614, %v615, %v607
        %v617 = vsel %vm610, %v613, %v616
        %v618 = vsel %vm608, nan, %v617
        %v619 = vsub.f32 %v618, %v513
        %v620 = vld [vmem:[%s3] sm:$0xff]
        %621 = vrot.lane.b32.xlu0 %v257, 104
        %v622 = vpop.permute.xlu0 %621
        %vm624 = vcmask 64512
        %v626 = vsel %vm624, %v619, 0
        %628 = vmatprep.subr.mxu0 0.0
        %629 = vmatpush1.msra.mxu0 0.0
        %630 = vmatprep.subr.mxu0 0.0
        %631 = vmatpush1.msra.mxu0 0.0
        %632 = vmatprep.subr.mxu0 0.0
        %633 = vmatpush1.msra.mxu0 0.0
        %634 = vmatprep.subr.mxu0 0.0
        %635 = vmatpush1.msra.mxu0 0.0
        %636 = vmatprep.subr.mxu0 0.0
        %637 = vmatpush1.msra.mxu0 0.0
        %638 = vmatprep.subr.mxu0 0.0
        %639 = vmatpush1.msra.mxu0 0.0
        %640 = vmatprep.subr.mxu0 0.0
        %641 = vmatpush1.msra.mxu0 0.0
        %642 = vmatprep.subr.mxu0 0.0
        %643 = vmatpush1.msra.mxu0 0.0
        %644 = vmatprep.subr.mxu0 0.0
        %645 = vmatpush1.msra.mxu0 0.0
        %646 = vmatprep.subr.mxu0 0.0
        %647 = vmatpush1.msra.mxu0 0.0
        %648 = vmatprep.subr.mxu0 0.0
        %649 = vmatpush1.msra.mxu0 0.0
        %650 = vmatprep.subr.mxu0 0.0
        %651 = vmatpush1.msra.mxu0 0.0
        %652 = vmatprep.subr.mxu0 0.0
        %653 = vmatpush1.msra.mxu0 0.0
        %654 = vmatprep.subr.mxu0 0.0
        %655 = vmatpush1.msra.mxu0 0.0
        %656 = vmatprep.subr.mxu0 0.0
        %657 = vmatpush1.msra.mxu0 0.0
        %658 = vmatprep.subr.mxu0 0.0
        %659 = vmatpush1.msra.mxu0 %v620
        %660 = vmatprep.subr.mxu0 0.0
        %661 = vmatpush2.msra.mxu0 0.0
        %662 = vmatprep.subr.mxu0 0.0
        %663 = vmatpush2.msra.mxu0 0.0
        %664 = vmatprep.subr.mxu0 0.0
        %665 = vmatpush2.msra.mxu0 0.0
        %666 = vmatprep.subr.mxu0 0.0
        %667 = vmatpush2.msra.mxu0 0.0
        %668 = vmatprep.subr.mxu0 0.0
        %669 = vmatpush2.msra.mxu0 0.0
        %670 = vmatprep.subr.mxu0 0.0
        %671 = vmatpush2.msra.mxu0 0.0
        %672 = vmatprep.subr.mxu0 0.0
        %673 = vmatpush2.msra.mxu0 0.0
        %674 = vmatprep.subr.mxu0 0.0
        %675 = vmatpush2.msra.mxu0 0.0
        %676 = vmatprep.subr.mxu0 0.0
        %677 = vmatpush2.msra.mxu0 0.0
        %678 = vmatprep.subr.mxu0 0.0
        %679 = vmatpush2.msra.mxu0 0.0
        %680 = vmatprep.subr.mxu0 0.0
        %681 = vmatpush2.msra.mxu0 0.0
        %682 = vmatprep.subr.mxu0 0.0
        %683 = vmatpush2.msra.mxu0 0.0
        %684 = vmatprep.subr.mxu0 0.0
        %685 = vmatpush2.msra.mxu0 0.0
        %686 = vmatprep.subr.mxu0 0.0
        %687 = vmatpush2.msra.mxu0 0.0
        %688 = vmatprep.subr.mxu0 0.0
        %689 = vmatpush2.msra.mxu0 0.0
        %690 = vmatprep.subr.mxu0 0.0
        %691 = vmatpush2.msra.mxu0 0.0
        %692 = vmatprep.mubr.f32.mxu0 0.0
        %693 = vmatmul.mubr.f32.gmra.mxu0 %v626
        %v694 = vpop.f32.mrf.mxu0
        %v695 = vadd.f32 %v622, %v694
        %v696 = vpop.f32.mrf.mxu0
        %697 = vdwg.mxu0
        %v698 = vand.u32 2147483647, %v695
        %vm699 = vcmp.le.f32.partialorder %v698, 0.7853982
        %vm700 = vcmp.lt.s32.totalorder %v695, 0
        %v701 = vand.u32 %v695, 2139095040
        %v702 = vshrl.u32 %v701, 23
        %v703 = vsub.s32 %v702, 127
        %v704 = vand.u32 2147483647, %v695
        %v705 = vand.u32 %v704, 8388607
        %v706 = vor.u32 %v705, 8388608
        %v707 = vsub.s32 0, %v706
        %v708 = vadd.s32 %v703, 1
        %vm709 = vcmp.gt.s32.totalorder %v708, 0
        %v710 = vsel %vm709, %v708, 0
        %v711 = vshrl.u32 %v710, 5
        %v712 = vand.u32 %v710, 31
        %v713 = vsub.s32 32, %v712
        %v714 = vshrl.u32 683565275, %v713
        %v715 = vshll.u32 683565275, %v712
        %v716 = vshrl.u32 2475754826, %v713
        %v717 = vor.u32 %v715, %v716
        %v718 = vshll.u32 2475754826, %v712
        %v719 = vshrl.u32 2131351028, %v713
        %v720 = vor.u32 %v718, %v719
        %v721 = vshll.u32 2131351028, %v712
        %v722 = vshrl.u32 2102212464, %v713
        %v723 = vor.u32 %v721, %v722
        %v724 = vshll.u32 2102212464, %v712
        %v725 = vshrl.u32 920167782, %v713
        %v726 = vor.u32 %v724, %v725
        %v727 = vshll.u32 920167782, %v712
        %v728 = vshrl.u32 1326507024, %v713
        %v729 = vor.u32 %v727, %v728
        %vm730 = vcmp.lt.s32.totalorder %v711, 1
        %vm731 = vcmp.lt.s32.totalorder %v711, 2
        %vm732 = vcmp.lt.s32.totalorder %v711, 3
        %vm733 = vcmp.lt.s32.totalorder %v711, 4
        %v734 = vsel %vm730, %v714, %v717
        %v735 = vsel %vm733, %v723, 2102212464
        %v736 = vsel %vm732, %v720, %v735
        %v737 = vsel %vm731, %v734, %v736
        %v738 = vsel %vm730, %v717, %v720
        %v739 = vsel %vm733, %v726, 920167782
        %v740 = vsel %vm732, %v723, %v739
        %v741 = vsel %vm731, %v738, %v740
        %v742 = vsel %vm730, %v720, %v723
        %v743 = vsel %vm733, %v729, 1326507024
        %v744 = vsel %vm732, %v726, %v743
        %v745 = vsel %vm731, %v742, %v744
        %v746 = vshll.u32 %v706, 8
        %v747 = vmul.u32.u64.compose %v746, %v745
        %v748 = vextract.low.u32 %v747
        %v749 = vextract.high.u32 %v747
        %v750 = vmul.u32.u64.compose %v746, %v741
        %v751 = vextract.low.u32 %v750
        %v752 = vextract.high.u32 %v750
        %v753 = vmul.u32 %v746, %v737
        %v754 = vadd.s32 %v749, %v751
        %vm755 = vc.u32 %v749, %v751
        %v756 = vadd.s32 %v752, 1
        %v757 = vsel %vm755, %v756, %v752
        %v758 = vadd.s32 %v753, %v757
        %v759 = vadd.s32 %v758, 536870912
        %v760 = vshrl.u32 %v759, 30
        %v761 = vshll.u32 %v760, 30
        %v762 = vsub.s32 %v758, %v761
        %vm763 = vcmp.lt.s32.totalorder %v762, 0
        %v764 = vsub.s32 0, %v762
        %v765 = vsel %vm763, %v764, %v762
        %v766 = vclz %v765
        %v767 = vsub.s32 %v766, 2
        %vm768 = vcmp.gt.s32.totalorder 0, %v767
        %v769 = vsel %vm768, 0, %v767
        %v770 = vsub.s32 32, %v769
        %v771 = vshll.u32 %v762, %v769
        %v772 = vshrl.u32 %v754, %v770
        %v773 = vor.u32 %v771, %v772
        %v774 = vsub.s32 4294967266, %v769
        %v775 = vadd.s32 %v774, 127
        %v776 = vshll.u32 %v775, 23
        %v777 = vor.u32 4788187, %v776
        %v778 = vand.u32 2147483647, %v777
        %v780 = vcvt.s32.f32 %v773
        %v781 = vmul.f32 %v780, %v778
        %v782 = vxor.u32 %v781, 2147483648
        %v783 = vsel %vm700, %v782, %v781
        %v784 = vsub.s32 4, %v760
        %v785 = vsel %vm700, %v784, %v760
        %v786 = vsel %vm699, %v695, %v783
        %v787 = vsel %vm699, 0, %v785
        %v788 = vcosq.f32.pop %v786
        %v789 = vsinq.f32.pop %v786
        %vm790 = vweird.f32 %v695
        %v791 = vand.u32 %v787, 3
        %vm792 = vcmp.lt.s32.totalorder %v791, 2
        %vm793 = vcmp.eq.s32.totalorder %v791, 0
        %v794 = vxor.u32 %v789, 2147483648
        %v795 = vsel %vm793, %v788, %v794
        %vm796 = vcmp.eq.s32.totalorder %v791, 2
        %v797 = vxor.u32 %v788, 2147483648
        %v798 = vsel %vm796, %v797, %v789
        %v799 = vsel %vm792, %v795, %v798
        %v800 = vsel %vm790, nan, %v799
        %v801 = vsub.f32 %v800, %v695
        %v802 = vld [vmem:[%s4] sm:$0xff]
        %v803 = vld [vmem:[%s4 + $0x8] sm:$0xff]
        %804 = vrot.lane.b32.xlu0 %v257, 88
        %v805 = vpop.permute.xlu0 %804
        %v808 = vsel %vm442, %v801, 0
        %810 = vmatprep.subr.mxu0 0.0
        %811 = vmatpush1.msra.mxu0 0.0
        %812 = vmatprep.subr.mxu0 0.0
        %813 = vmatpush1.msra.mxu0 0.0
        %814 = vmatprep.subr.mxu0 0.0
        %815 = vmatpush1.msra.mxu0 0.0
        %816 = vmatprep.subr.mxu0 0.0
        %817 = vmatpush1.msra.mxu0 0.0
        %818 = vmatprep.subr.mxu0 0.0
        %819 = vmatpush1.msra.mxu0 0.0
        %820 = vmatprep.subr.mxu0 0.0
        %821 = vmatpush1.msra.mxu0 0.0
        %822 = vmatprep.subr.mxu0 0.0
        %823 = vmatpush1.msra.mxu0 0.0
        %824 = vmatprep.subr.mxu0 0.0
        %825 = vmatpush1.msra.mxu0 0.0
        %826 = vmatprep.subr.mxu0 0.0
        %827 = vmatpush1.msra.mxu0 0.0
        %828 = vmatprep.subr.mxu0 0.0
        %829 = vmatpush1.msra.mxu0 0.0
        %830 = vmatprep.subr.mxu0 0.0
        %831 = vmatpush1.msra.mxu0 0.0
        %832 = vmatprep.subr.mxu0 0.0
        %833 = vmatpush1.msra.mxu0 0.0
        %834 = vmatprep.subr.mxu0 0.0
        %835 = vmatpush1.msra.mxu0 0.0
        %836 = vmatprep.subr.mxu0 0.0
        %837 = vmatpush1.msra.mxu0 0.0
        %838 = vmatprep.subr.mxu0 0.0
        %839 = vmatpush1.msra.mxu0 %v803
        %840 = vmatprep.subr.mxu0 0.0
        %841 = vmatpush1.msra.mxu0 %v802
        %842 = vmatprep.subr.mxu0 0.0
        %843 = vmatpush2.msra.mxu0 0.0
        %844 = vmatprep.subr.mxu0 0.0
        %845 = vmatpush2.msra.mxu0 0.0
        %846 = vmatprep.subr.mxu0 0.0
        %847 = vmatpush2.msra.mxu0 0.0
        %848 = vmatprep.subr.mxu0 0.0
        %849 = vmatpush2.msra.mxu0 0.0
        %850 = vmatprep.subr.mxu0 0.0
        %851 = vmatpush2.msra.mxu0 0.0
        %852 = vmatprep.subr.mxu0 0.0
        %853 = vmatpush2.msra.mxu0 0.0
        %854 = vmatprep.subr.mxu0 0.0
        %855 = vmatpush2.msra.mxu0 0.0
        %856 = vmatprep.subr.mxu0 0.0
        %857 = vmatpush2.msra.mxu0 0.0
        %858 = vmatprep.subr.mxu0 0.0
        %859 = vmatpush2.msra.mxu0 0.0
        %860 = vmatprep.subr.mxu0 0.0
        %861 = vmatpush2.msra.mxu0 0.0
        %862 = vmatprep.subr.mxu0 0.0
        %863 = vmatpush2.msra.mxu0 0.0
        %864 = vmatprep.subr.mxu0 0.0
        %865 = vmatpush2.msra.mxu0 0.0
        %866 = vmatprep.subr.mxu0 0.0
        %867 = vmatpush2.msra.mxu0 0.0
        %868 = vmatprep.subr.mxu0 0.0
        %869 = vmatpush2.msra.mxu0 0.0
        %870 = vmatprep.subr.mxu0 0.0
        %871 = vmatpush2.msra.mxu0 0.0
        %872 = vmatprep.subr.mxu0 0.0
        %873 = vmatpush2.msra.mxu0 0.0
        %874 = vmatprep.mubr.f32.mxu0 0.0
        %875 = vmatmul.mubr.f32.gmra.mxu0 %v808
        %v876 = vpop.f32.mrf.mxu0
        %v877 = vadd.f32 %v805, %v876
        %v878 = vpop.f32.mrf.mxu0
        %879 = vdwg.mxu0
        %v880 = vand.u32 2147483647, %v877
        %vm881 = vcmp.le.f32.partialorder %v880, 0.7853982
        %vm882 = vcmp.lt.s32.totalorder %v877, 0
        %v883 = vand.u32 %v877, 2139095040
        %v884 = vshrl.u32 %v883, 23
        %v885 = vsub.s32 %v884, 127
        %v886 = vand.u32 2147483647, %v877
        %v887 = vand.u32 %v886, 8388607
        %v888 = vor.u32 %v887, 8388608
        %v889 = vsub.s32 0, %v888
        %v890 = vadd.s32 %v885, 1
        %vm891 = vcmp.gt.s32.totalorder %v890, 0
        %v892 = vsel %vm891, %v890, 0
        %v893 = vshrl.u32 %v892, 5
        %v894 = vand.u32 %v892, 31
        %v895 = vsub.s32 32, %v894
        %v896 = vshrl.u32 683565275, %v895
        %v897 = vshll.u32 683565275, %v894
        %v898 = vshrl.u32 2475754826, %v895
        %v899 = vor.u32 %v897, %v898
        %v900 = vshll.u32 2475754826, %v894
        %v901 = vshrl.u32 2131351028, %v895
        %v902 = vor.u32 %v900, %v901
        %v903 = vshll.u32 2131351028, %v894
        %v904 = vshrl.u32 2102212464, %v895
        %v905 = vor.u32 %v903, %v904
        %v906 = vshll.u32 2102212464, %v894
        %v907 = vshrl.u32 920167782, %v895
        %v908 = vor.u32 %v906, %v907
        %v909 = vshll.u32 920167782, %v894
        %v910 = vshrl.u32 1326507024, %v895
        %v911 = vor.u32 %v909, %v910
        %vm912 = vcmp.lt.s32.totalorder %v893, 1
        %vm913 = vcmp.lt.s32.totalorder %v893, 2
        %vm914 = vcmp.lt.s32.totalorder %v893, 3
        %vm915 = vcmp.lt.s32.totalorder %v893, 4
        %v916 = vsel %vm912, %v896, %v899
        %v917 = vsel %vm915, %v905, 2102212464
        %v918 = vsel %vm914, %v902, %v917
        %v919 = vsel %vm913, %v916, %v918
        %v920 = vsel %vm912, %v899, %v902
        %v921 = vsel %vm915, %v908, 920167782
        %v922 = vsel %vm914, %v905, %v921
        %v923 = vsel %vm913, %v920, %v922
        %v924 = vsel %vm912, %v902, %v905
        %v925 = vsel %vm915, %v911, 1326507024
        %v926 = vsel %vm914, %v908, %v925
        %v927 = vsel %vm913, %v924, %v926
        %v928 = vshll.u32 %v888, 8
        %v929 = vmul.u32.u64.compose %v928, %v927
        %v930 = vextract.low.u32 %v929
        %v931 = vextract.high.u32 %v929
        %v932 = vmul.u32.u64.compose %v928, %v923
        %v933 = vextract.low.u32 %v932
        %v934 = vextract.high.u32 %v932
        %v935 = vmul.u32 %v928, %v919
        %v936 = vadd.s32 %v931, %v933
        %vm937 = vc.u32 %v931, %v933
        %v938 = vadd.s32 %v934, 1
        %v939 = vsel %vm937, %v938, %v934
        %v940 = vadd.s32 %v935, %v939
        %v941 = vadd.s32 %v940, 536870912
        %v942 = vshrl.u32 %v941, 30
        %v943 = vshll.u32 %v942, 30
        %v944 = vsub.s32 %v940, %v943
        %vm945 = vcmp.lt.s32.totalorder %v944, 0
        %v946 = vsub.s32 0, %v944
        %v947 = vsel %vm945, %v946, %v944
        %v948 = vclz %v947
        %v949 = vsub.s32 %v948, 2
        %vm950 = vcmp.gt.s32.totalorder 0, %v949
        %v951 = vsel %vm950, 0, %v949
        %v952 = vsub.s32 32, %v951
        %v953 = vshll.u32 %v944, %v951
        %v954 = vshrl.u32 %v936, %v952
        %v955 = vor.u32 %v953, %v954
        %v956 = vsub.s32 4294967266, %v951
        %v957 = vadd.s32 %v956, 127
        %v958 = vshll.u32 %v957, 23
        %v959 = vor.u32 4788187, %v958
        %v960 = vand.u32 2147483647, %v959
        %v962 = vcvt.s32.f32 %v955
        %v963 = vmul.f32 %v962, %v960
        %v964 = vxor.u32 %v963, 2147483648
        %v965 = vsel %vm882, %v964, %v963
        %v966 = vsub.s32 4, %v942
        %v967 = vsel %vm882, %v966, %v942
        %v968 = vsel %vm881, %v877, %v965
        %v969 = vsel %vm881, 0, %v967
        %v970 = vcosq.f32.pop %v968
        %v971 = vsinq.f32.pop %v968
        %vm972 = vweird.f32 %v877
        %v973 = vand.u32 %v969, 3
        %vm974 = vcmp.lt.s32.totalorder %v973, 2
        %vm975 = vcmp.eq.s32.totalorder %v973, 0
        %v976 = vxor.u32 %v971, 2147483648
        %v977 = vsel %vm975, %v970, %v976
        %vm978 = vcmp.eq.s32.totalorder %v973, 2
        %v979 = vxor.u32 %v970, 2147483648
        %v980 = vsel %vm978, %v979, %v971
        %v981 = vsel %vm974, %v977, %v980
        %v982 = vsel %vm972, nan, %v981
        %v983 = vsub.f32 %v982, %v877
        %984 = vst.msk [vmem:[%s242] sm:$0xff] %vm259, %v983
        %s985 = sand.u32 %s159, 1
        %s986 = scalar_lea.sflag [#allocation3], %s985
        %s987 = sand.u32 %s159, 1
        %s988 = smul.addr %s987, 8
        %s989 = scalar_lea.vmem [#allocation2], %s988
        // Predicated region
        $region45: #{tpu_custom_call.1} parent=43 // pred_check
          %p990 = pneg %p169
        $region46: #{tpu_custom_call.1} parent=43 // pred_check_branch
          %992 = sbr.rel (%p990) target = $region48
        $region47: #{tpu_custom_call.1} parent=43 // pred_region
          %s994 = ssub.s32 128, 128
          %995 = vsyncadd %s986, %s994
          %s996 = smul.addr %s20, 128
          %s997 = scalar_lea.hbm %s6, %s996
          %s999 = sshll.u32 %s989, 4
          %s1000 = int_to_ptr.vmem [resolvable:$true] %s999
          %1002 = dma.vmem_to_hbm [thread:$0]  %s1000, 128, %s997, %s986
        $region48: #{tpu_custom_call.1} parent=43 // pred_fallthru
          _
      $region44: #{tpu_custom_call.1} parent=5 // pred_fallthru
        _
      %p1003 = scmp.le.s32.totalorder 2, %s15
      // Predicated region
      $region49: #{tpu_custom_call.1} parent=5 // pred_check
        %p1004 = pneg %p1003
      $region50: #{tpu_custom_call.1} parent=5 // pred_check_branch
        %1006 = sbr.rel (%p1004) target = $region52
      $region51: #{tpu_custom_call.1} parent=5 // pred_region
        %s1007 = ssub.s32 %s15, 2
        // Predicated region
        $region53: #{tpu_custom_call.1} parent=51 // pred_check
          %p1008 = pneg %p175
        $region54: #{tpu_custom_call.1} parent=51 // pred_check_branch
          %1010 = sbr.rel (%p1008) target = $region56
        $region55: #{tpu_custom_call.1} parent=51 // pred_region
          %s1011 = sand.u32 %s160, 1
          %s1012 = scalar_lea.sflag [#allocation3], %s1011
          %s1013 = sand.u32 %s160, 1
          %s1014 = smul.addr %s1013, 8
          %s1015 = scalar_lea.vmem [#allocation2], %s1014
          %1016 = dma.done %s1012, 128
        $region56: #{tpu_custom_call.1} parent=51 // pred_fallthru
          _
      $region52: #{tpu_custom_call.1} parent=5 // pred_fallthru
        _
    $region6: #{tpu_custom_call.1} parent=1 // loop_footer
      %s19 = sadd.s32 1, %s15
    $region7: #{tpu_custom_call.1} parent=1 // loop_footer_branch
      %14 = sbr.rel target = $region3
    $region8: #{tpu_custom_call.1} parent=1 // loop_exit
      _
    %1017 = vsyncpa [#allocation3], 1
    %s1018 = scalar_lea.sflag [#allocation3], 1
    %1019 = vsyncpa %s1018, 1

</llo_original>
